<compile_context>
chip_gen: v6e
topology: v6e:2x2x1
jax: 0.10.0
libtpu: 0.0.40
codegen_flags: <defaults>
</compile_context>

<pallas_src>
import functools

import jax
import jax.numpy as jnp
from jax.experimental import pallas as pl
from jax.experimental.pallas import tpu as pltpu

HIDDEN = 256
_LANE = 128
_SUBLANE = 8


def _leaky_relu(x, slope):
    return jnp.where(x > 0, x, slope * x)


def _pad_to(n, m):
    return ((n + m - 1) // m) * m


def actor_kernel(x_ref, w1_ref, b1_ref, w2_ref, b2_ref, w3_ref, b3_ref,
                 wmu_ref, bmu_ref, out_ref):
    # x arrives f32; cast the loaded tile to bf16 so every matmul runs
    # bf16 x bf16 -> f32 on the MXU.  leaky_relu is done in f32, then recast
    # to bf16 for the next layer's MXU pass (f32 leaky_relu is also the right
    # choice on v5e, which has no bf16 VALU).
    h = jnp.dot(x_ref[...].astype(jnp.bfloat16), w1_ref[...],
                preferred_element_type=jnp.float32) + b1_ref[...]
    h = _leaky_relu(h, 0.01).astype(jnp.bfloat16)

    h = jnp.dot(h, w2_ref[...],
                preferred_element_type=jnp.float32) + b2_ref[...]
    h = _leaky_relu(h, 0.01).astype(jnp.bfloat16)

    h = jnp.dot(h, w3_ref[...],
                preferred_element_type=jnp.float32) + b3_ref[...]
    h = _leaky_relu(h, 0.3).astype(jnp.bfloat16)

    mu = jnp.dot(h, wmu_ref[...],
                 preferred_element_type=jnp.float32) + bmu_ref[...]
    out_ref[...] = mu.astype(out_ref.dtype)


def prepare_params(params):
    """One-time repack of the Actor weights for the kernel.

    Returns bf16 (in, out) weight matrices, f32 (1, out) bias rows, with the
    fc_mu output dimension zero-padded to a multiple of 128 so the kernel's
    output store stays lane-dense (unmasked vst).  Call once, reuse forever.
    """
    w1, b1, w2, b2, w3, b3, wmu, bmu = params
    act_dim = wmu.shape[1]
    act_p = _pad_to(act_dim, _LANE)
    bf16 = jnp.bfloat16

    w1_p = w1.astype(bf16)                      # obs dim left unpadded
    w2_p = w2.astype(bf16)
    w3_p = w3.astype(bf16)
    wmu_p = jnp.zeros((wmu.shape[0], act_p), bf16).at[:, :act_dim].set(
        wmu.astype(bf16))

    b1_p = b1.reshape(1, -1).astype(jnp.float32)
    b2_p = b2.reshape(1, -1).astype(jnp.float32)
    b3_p = b3.reshape(1, -1).astype(jnp.float32)
    bmu_p = jnp.zeros((1, act_p), jnp.float32).at[:, :act_dim].set(
        bmu.reshape(1, -1).astype(jnp.float32))

    packed = (w1_p, b1_p, w2_p, b2_p, w3_p, b3_p, wmu_p, bmu_p)
    return packed, act_dim


@functools.partial(jax.jit, static_argnames=("act_dim", "tile_batch"))
def actor_forward(x, packed_params, act_dim, tile_batch=1024):
    """x: (batch, obs_dim) f32.  packed_params: output of prepare_params()."""
    w1, b1, w2, b2, w3, b3, wmu, bmu = packed_params
    batch, obs_dim = x.shape
    act_p = wmu.shape[1]

    # Divisor-friendly batch tiling: smallest 8-aligned tile that covers the
    # batch in ceil(batch / tile_batch) grid steps.  Avoids a mostly-empty
    # last tile (batch=300 -> tb=304, one step; batch=2 -> tb=8, one step).
    n_tiles = max(1, pl.cdiv(batch, tile_batch))
    tb = _pad_to(pl.cdiv(batch, n_tiles), _SUBLANE)
    batch_p = _pad_to(batch, tb)

    x_p = x if batch_p == batch else jnp.pad(x, ((0, batch_p - batch), (0, 0)))

    resident = lambda shape: pl.BlockSpec(shape, lambda i: (0,) * len(shape))

    out_p = pl.pallas_call(
        actor_kernel,
        out_shape=jax.ShapeDtypeStruct((batch_p, act_p), jnp.float32),
        grid=(batch_p // tb,),
        in_specs=[
            # x streams per batch tile; obs dim = full array width (masked
            # input loads are cheap, and it cuts x HBM bytes vs lane-padding).
            pl.BlockSpec((tb, obs_dim), lambda i: (i, 0)),
            # Weights/biases: constant index_map -> stay VMEM-resident.
            resident(w1.shape), resident(b1.shape),
            resident(w2.shape), resident(b2.shape),
            resident(w3.shape), resident(b3.shape),
            resident(wmu.shape), resident(bmu.shape),
        ],
        out_specs=pl.BlockSpec((tb, act_p), lambda i: (i, 0)),
        compiler_params=pltpu.CompilerParams(
            dimension_semantics=("parallel",)),
    )(x_p, w1, b1, w2, b2, w3, b3, wmu, bmu)

    return out_p[:batch, :act_dim]


def init_linear(key, fan_in, fan_out):
    # Deterministic init mimicking PyTorch's U(-1/sqrt(fan_in), 1/sqrt(fan_in)).
    kw, kb = jax.random.split(key)
    bound = 1.0 / jnp.sqrt(jnp.float32(fan_in))
    w = jax.random.uniform(kw, (fan_in, fan_out), jnp.float32, -bound, bound)
    b = jax.random.uniform(kb, (1, fan_out), jnp.float32, -bound, bound)
    return w, b


def reference_forward(x, params):
    # Pure-JAX reference mirroring the kernel's numerics (bf16 operands,
    # f32 accumulation, f32 leaky_relu).
    w1, b1, w2, b2, w3, b3, wmu, bmu = params

    def dot16(a, w):
        return jnp.dot(a.astype(jnp.bfloat16), w.astype(jnp.bfloat16),
                       preferred_element_type=jnp.float32)

    h = _leaky_relu(dot16(x, w1) + b1, 0.01)
    h = _leaky_relu(dot16(h, w2) + b2, 0.01)
    h = _leaky_relu(dot16(h, w3) + b3, 0.3)
    return dot16(h, wmu) + bmu


if __name__ == "__main__":
    key = jax.random.PRNGKey(0)
    k_x, k_x2, k1, k2, k3, k4 = jax.random.split(key, 6)

    batch = 2
    obs_dim = 16   # np.prod(env.single_observation_space.shape) stand-in
    act_dim = 4    # np.prod(env.single_action_space.shape) stand-in

    x = jax.random.normal(k_x, (batch, obs_dim), jnp.float32)

    w1, b1 = init_linear(k1, obs_dim, HIDDEN)
    w2, b2 = init_linear(k2, HIDDEN, HIDDEN)
    w3, b3 = init_linear(k3, HIDDEN, HIDDEN)
    wmu, bmu = init_linear(k4, HIDDEN, act_dim)
    params = (w1, b1, w2, b2, w3, b3, wmu, bmu)

    # One-time weight repack (hoisted out of the per-call path).
    packed, act_dim_packed = prepare_params(params)
    assert act_dim_packed == act_dim

    out = actor_forward(x, packed, act_dim)
    out = jax.block_until_ready(out)
    ref = reference_forward(x, params)
    assert out.shape == (batch, act_dim)
    assert jnp.allclose(out, ref, atol=1e-3, rtol=1e-3), "mismatch vs JAX reference"

    # Ragged batch to exercise the divisor-friendly tiling + row padding.
    x2 = jax.random.normal(k_x2, (37, obs_dim), jnp.float32)
    out2 = jax.block_until_ready(actor_forward(x2, packed, act_dim))
    ref2 = reference_forward(x2, params)
    assert out2.shape == (37, act_dim)
    assert jnp.allclose(out2, ref2, atol=1e-3, rtol=1e-3), "mismatch (ragged batch)"

    print("KERNEL_OK")
</pallas_src>

<mosaic_0001>
module attributes {stable_mosaic.version = 11 : i64} {
  func.func @actor_kernel(%arg0: i32, %arg1: memref<8x16xf32, #tpu.memory_space<vmem>>, %arg2: memref<16x256xbf16, #tpu.memory_space<vmem>>, %arg3: memref<1x256xf32, #tpu.memory_space<vmem>>, %arg4: memref<256x256xbf16, #tpu.memory_space<vmem>>, %arg5: memref<1x256xf32, #tpu.memory_space<vmem>>, %arg6: memref<256x256xbf16, #tpu.memory_space<vmem>>, %arg7: memref<1x256xf32, #tpu.memory_space<vmem>>, %arg8: memref<256x128xbf16, #tpu.memory_space<vmem>>, %arg9: memref<1x128xf32, #tpu.memory_space<vmem>>, %arg10: memref<8x128xf32, #tpu.memory_space<vmem>>) attributes {dimension_semantics = [#tpu.dimension_semantics<parallel>], iteration_bounds = array<i64: 1>, scalar_prefetch = 0 : i64, scratch_operands = 0 : i64, tpu.core_type = #tpu.core_type<tc>, window_params = [{transform_indices = @transform_0, window_bounds = array<i64: 8, 16>}, {pipeline_mode = #tpu.pipeline_mode<synchronous>, transform_indices = @transform_1, window_bounds = array<i64: 16, 256>}, {pipeline_mode = #tpu.pipeline_mode<synchronous>, transform_indices = @transform_2, window_bounds = array<i64: 1, 256>}, {pipeline_mode = #tpu.pipeline_mode<synchronous>, transform_indices = @transform_3, window_bounds = array<i64: 256, 256>}, {pipeline_mode = #tpu.pipeline_mode<synchronous>, transform_indices = @transform_4, window_bounds = array<i64: 1, 256>}, {pipeline_mode = #tpu.pipeline_mode<synchronous>, transform_indices = @transform_5, window_bounds = array<i64: 256, 256>}, {pipeline_mode = #tpu.pipeline_mode<synchronous>, transform_indices = @transform_6, window_bounds = array<i64: 1, 256>}, {pipeline_mode = #tpu.pipeline_mode<synchronous>, transform_indices = @transform_7, window_bounds = array<i64: 256, 128>}, {pipeline_mode = #tpu.pipeline_mode<synchronous>, transform_indices = @transform_8, window_bounds = array<i64: 1, 128>}, {transform_indices = @transform_9, window_bounds = array<i64: 8, 128>}]} {
    %c0 = arith.constant 0 : index
    %c0_0 = arith.constant 0 : index
    %0 = vector.load %arg1[%c0, %c0_0] : memref<8x16xf32, #tpu.memory_space<vmem>>, vector<8x16xf32>
    %1 = arith.truncf %0 : vector<8x16xf32> to vector<8x16xbf16>
    %c0_1 = arith.constant 0 : index
    %c0_2 = arith.constant 0 : index
    %2 = vector.load %arg2[%c0_1, %c0_2] : memref<16x256xbf16, #tpu.memory_space<vmem>>, vector<16x256xbf16>
    %cst = arith.constant dense<0.000000e+00> : vector<8x256xf32>
    %3 = tpu.matmul %1, %2, %cst {dimension_numbers = #tpu.dot_dimension_numbers<[1], [0], [0], [1], [0, 0, 1, 1], [], []>} : vector<8x16xbf16>, vector<16x256xbf16>, vector<8x256xf32> -> vector<8x256xf32>
    %c0_3 = arith.constant 0 : index
    %c0_4 = arith.constant 0 : index
    %4 = vector.load %arg3[%c0_3, %c0_4] : memref<1x256xf32, #tpu.memory_space<vmem>>, vector<1x256xf32>
    %5 = vector.broadcast %4 : vector<1x256xf32> to vector<8x256xf32>
    %6 = arith.addf %3, %5 : vector<8x256xf32>
    %cst_5 = arith.constant 0.000000e+00 : f32
    %7 = vector.broadcast %cst_5 : f32 to vector<8x256xf32>
    %8 = arith.cmpf ogt, %6, %7 : vector<8x256xf32>
    %cst_6 = arith.constant 0.00999999977 : f32
    %9 = vector.broadcast %cst_6 : f32 to vector<8x256xf32>
    %10 = arith.mulf %9, %6 : vector<8x256xf32>
    %11 = arith.select %8, %6, %10 : vector<8x256xi1>, vector<8x256xf32>
    %12 = arith.truncf %11 : vector<8x256xf32> to vector<8x256xbf16>
    %c0_7 = arith.constant 0 : index
    %c0_8 = arith.constant 0 : index
    %13 = vector.load %arg4[%c0_7, %c0_8] : memref<256x256xbf16, #tpu.memory_space<vmem>>, vector<256x256xbf16>
    %cst_9 = arith.constant dense<0.000000e+00> : vector<8x256xf32>
    %14 = tpu.matmul %12, %13, %cst_9 {dimension_numbers = #tpu.dot_dimension_numbers<[1], [0], [0], [1], [0, 0, 1, 1], [], []>} : vector<8x256xbf16>, vector<256x256xbf16>, vector<8x256xf32> -> vector<8x256xf32>
    %c0_10 = arith.constant 0 : index
    %c0_11 = arith.constant 0 : index
    %15 = vector.load %arg5[%c0_10, %c0_11] : memref<1x256xf32, #tpu.memory_space<vmem>>, vector<1x256xf32>
    %16 = vector.broadcast %15 : vector<1x256xf32> to vector<8x256xf32>
    %17 = arith.addf %14, %16 : vector<8x256xf32>
    %cst_12 = arith.constant 0.000000e+00 : f32
    %18 = vector.broadcast %cst_12 : f32 to vector<8x256xf32>
    %19 = arith.cmpf ogt, %17, %18 : vector<8x256xf32>
    %cst_13 = arith.constant 0.00999999977 : f32
    %20 = vector.broadcast %cst_13 : f32 to vector<8x256xf32>
    %21 = arith.mulf %20, %17 : vector<8x256xf32>
    %22 = arith.select %19, %17, %21 : vector<8x256xi1>, vector<8x256xf32>
    %23 = arith.truncf %22 : vector<8x256xf32> to vector<8x256xbf16>
    %c0_14 = arith.constant 0 : index
    %c0_15 = arith.constant 0 : index
    %24 = vector.load %arg6[%c0_14, %c0_15] : memref<256x256xbf16, #tpu.memory_space<vmem>>, vector<256x256xbf16>
    %cst_16 = arith.constant dense<0.000000e+00> : vector<8x256xf32>
    %25 = tpu.matmul %23, %24, %cst_16 {dimension_numbers = #tpu.dot_dimension_numbers<[1], [0], [0], [1], [0, 0, 1, 1], [], []>} : vector<8x256xbf16>, vector<256x256xbf16>, vector<8x256xf32> -> vector<8x256xf32>
    %c0_17 = arith.constant 0 : index
    %c0_18 = arith.constant 0 : index
    %26 = vector.load %arg7[%c0_17, %c0_18] : memref<1x256xf32, #tpu.memory_space<vmem>>, vector<1x256xf32>
    %27 = vector.broadcast %26 : vector<1x256xf32> to vector<8x256xf32>
    %28 = arith.addf %25, %27 : vector<8x256xf32>
    %cst_19 = arith.constant 0.000000e+00 : f32
    %29 = vector.broadcast %cst_19 : f32 to vector<8x256xf32>
    %30 = arith.cmpf ogt, %28, %29 : vector<8x256xf32>
    %cst_20 = arith.constant 3.000000e-01 : f32
    %31 = vector.broadcast %cst_20 : f32 to vector<8x256xf32>
    %32 = arith.mulf %31, %28 : vector<8x256xf32>
    %33 = arith.select %30, %28, %32 : vector<8x256xi1>, vector<8x256xf32>
    %34 = arith.truncf %33 : vector<8x256xf32> to vector<8x256xbf16>
    %c0_21 = arith.constant 0 : index
    %c0_22 = arith.constant 0 : index
    %35 = vector.load %arg8[%c0_21, %c0_22] : memref<256x128xbf16, #tpu.memory_space<vmem>>, vector<256x128xbf16>
    %cst_23 = arith.constant dense<0.000000e+00> : vector<8x128xf32>
    %36 = tpu.matmul %34, %35, %cst_23 {dimension_numbers = #tpu.dot_dimension_numbers<[1], [0], [0], [1], [0, 0, 1, 1], [], []>} : vector<8x256xbf16>, vector<256x128xbf16>, vector<8x128xf32> -> vector<8x128xf32>
    %c0_24 = arith.constant 0 : index
    %c0_25 = arith.constant 0 : index
    %37 = vector.load %arg9[%c0_24, %c0_25] : memref<1x128xf32, #tpu.memory_space<vmem>>, vector<1x128xf32>
    %38 = vector.broadcast %37 : vector<1x128xf32> to vector<8x128xf32>
    %39 = arith.addf %36, %38 : vector<8x128xf32>
    %c0_26 = arith.constant 0 : index
    %c0_27 = arith.constant 0 : index
    %40 = vector.load %arg10[%c0_26, %c0_27] : memref<8x128xf32, #tpu.memory_space<vmem>>, vector<8x128xf32>
    tpu.vector_store %arg10[%c0_26, %c0_27], %39 {strides = array<i32>} : memref<8x128xf32, #tpu.memory_space<vmem>>, vector<8x128xf32>,
    return
  }
  func.func @transform_0(%arg0: i32) -> (i32, i32) {
    %c0_i32 = arith.constant 0 : i32
    %c0_i32_0 = arith.constant 0 : i32
    return %arg0, %c0_i32 : i32, i32
  }
  func.func @transform_1(%arg0: i32) -> (i32, i32) {
    %c0_i32 = arith.constant 0 : i32
    %c0_i32_0 = arith.constant 0 : i32
    %c0_i32_1 = arith.constant 0 : i32
    return %c0_i32, %c0_i32_0 : i32, i32
  }
  func.func @transform_2(%arg0: i32) -> (i32, i32) {
    %c0_i32 = arith.constant 0 : i32
    %c0_i32_0 = arith.constant 0 : i32
    %c0_i32_1 = arith.constant 0 : i32
    return %c0_i32, %c0_i32_0 : i32, i32
  }
  func.func @transform_3(%arg0: i32) -> (i32, i32) {
    %c0_i32 = arith.constant 0 : i32
    %c0_i32_0 = arith.constant 0 : i32
    %c0_i32_1 = arith.constant 0 : i32
    return %c0_i32, %c0_i32_0 : i32, i32
  }
  func.func @transform_4(%arg0: i32) -> (i32, i32) {
    %c0_i32 = arith.constant 0 : i32
    %c0_i32_0 = arith.constant 0 : i32
    %c0_i32_1 = arith.constant 0 : i32
    return %c0_i32, %c0_i32_0 : i32, i32
  }
  func.func @transform_5(%arg0: i32) -> (i32, i32) {
    %c0_i32 = arith.constant 0 : i32
    %c0_i32_0 = arith.constant 0 : i32
    %c0_i32_1 = arith.constant 0 : i32
    return %c0_i32, %c0_i32_0 : i32, i32
  }
  func.func @transform_6(%arg0: i32) -> (i32, i32) {
    %c0_i32 = arith.constant 0 : i32
    %c0_i32_0 = arith.constant 0 : i32
    %c0_i32_1 = arith.constant 0 : i32
    return %c0_i32, %c0_i32_0 : i32, i32
  }
  func.func @transform_7(%arg0: i32) -> (i32, i32) {
    %c0_i32 = arith.constant 0 : i32
    %c0_i32_0 = arith.constant 0 : i32
    %c0_i32_1 = arith.constant 0 : i32
    return %c0_i32, %c0_i32_0 : i32, i32
  }
  func.func @transform_8(%arg0: i32) -> (i32, i32) {
    %c0_i32 = arith.constant 0 : i32
    %c0_i32_0 = arith.constant 0 : i32
    %c0_i32_1 = arith.constant 0 : i32
    return %c0_i32, %c0_i32_0 : i32, i32
  }
  func.func @transform_9(%arg0: i32) -> (i32, i32) {
    %c0_i32 = arith.constant 0 : i32
    %c0_i32_0 = arith.constant 0 : i32
    return %arg0, %c0_i32 : i32, i32
  }
}

</mosaic_0001>

<llo_original>
// kernel: actor_forward.1
$region0: #{actor_forward.1}
  #allocation0 [shape = 'u32[]', space=smem, size = 0x4, offset = 0x4, fixed_abs, tag = 'smem constant byte address 0x4 - core index']
  #allocation1 [shape = 'u32[144,128]{1,0:T(1,128)}', space=vmem, size = 0x12000, scoped, tag = 'internal scratch']
  %s0 = inlined_call_operand.vmem [shape: f32[8,16], index: 0, kind: input, shape index: {}]
  %s1 = inlined_call_operand.hbm [shape: bf16[16,256], index: 1, kind: input, shape index: {}]
  %s2 = inlined_call_operand.vmem [shape: f32[1,256], index: 2, kind: input, shape index: {}]
  %s3 = inlined_call_operand.hbm [shape: bf16[256,256], index: 3, kind: input, shape index: {}]
  %s4 = inlined_call_operand.vmem [shape: f32[1,256], index: 4, kind: input, shape index: {}]
  %s5 = inlined_call_operand.hbm [shape: bf16[256,256], index: 5, kind: input, shape index: {}]
  %s6 = inlined_call_operand.vmem [shape: f32[1,256], index: 6, kind: input, shape index: {}]
  %s7 = inlined_call_operand.hbm [shape: bf16[256,128], index: 7, kind: input, shape index: {}]
  %s8 = inlined_call_operand.vmem [shape: f32[1,128], index: 8, kind: input, shape index: {}]
  %s9 = inlined_call_operand.vmem [shape: f32[8,128], index: 9, kind: output, shape index: {}]
  %s10 = sld [smem:[#allocation0]]
  $region62: #{actor_forward.1} parent=0
    _
  %s12 = ssub.s32 1, %s10
  %s13 = scalar_select 0, %s12, %s10
  $region1: #{actor_forward.1} parent=0
    #allocation2 [shape = 'u8[8192]{0}', space=vmem, size = 0x2000, scoped, tag = 'input window, operand 1, single buffered']
    #allocation3 [shape = 's32[1]{0}', space=sflag, size = 0x4, scoped, tag = 'scoped memory for actor_forward.1']
    #allocation4 [shape = 'u8[131072]{0}', space=vmem, size = 0x20000, scoped, tag = 'input window, operand 3, single buffered']
    #allocation5 [shape = 's32[1]{0}', space=sflag, size = 0x4, scoped, tag = 'scoped memory for actor_forward.1']
    #allocation6 [shape = 'u8[131072]{0}', space=vmem, size = 0x20000, scoped, tag = 'input window, operand 5, single buffered']
    #allocation7 [shape = 'u8[65536]{0}', space=vmem, size = 0x10000, scoped, tag = 'input window, operand 7, single buffered']
    #allocation8 [shape = 's32[1]{0}', space=sflag, size = 0x4, scoped, tag = 'scoped memory for actor_forward.1']
    %14 = vsyncpa [#allocation3], 0
    %15 = vsyncpa [#allocation5], 0
    %16 = vsyncpa [#allocation8], 0
    // Predicated region
    $region2: #{actor_forward.1} parent=1 // pred_check
      _
    $region3: #{actor_forward.1} parent=1 // pred_check_branch
      %18 = sbr.rel (0) target = $region5
    $region4: #{actor_forward.1} parent=1 // pred_region
      _
    $region5: #{actor_forward.1} parent=1 // pred_fallthru
      _
    // Predicated region
    $region6: #{actor_forward.1} parent=1 // pred_check
      _
    $region7: #{actor_forward.1} parent=1 // pred_check_branch
      %20 = sbr.rel (0) target = $region9
    $region8: #{actor_forward.1} parent=1 // pred_region
      %s22 = ssub.s32 256, 256
      %23 = vsyncadd [#allocation3], %s22
      %s24 = sshll.u32 [#allocation2], 4
      %s25 = int_to_ptr.vmem [resolvable:$true] %s24
      %30 = dma.hbm_to_vmem [thread:$0]  %s1, 256, %s25, [#allocation3], 128, 128, 8
    $region9: #{actor_forward.1} parent=1 // pred_fallthru
      _
    // Predicated region
    $region10: #{actor_forward.1} parent=1 // pred_check
      _
    $region11: #{actor_forward.1} parent=1 // pred_check_branch
      %32 = sbr.rel (0) target = $region13
    $region12: #{actor_forward.1} parent=1 // pred_region
      _
    $region13: #{actor_forward.1} parent=1 // pred_fallthru
      _
    // Predicated region
    $region14: #{actor_forward.1} parent=1 // pred_check
      _
    $region15: #{actor_forward.1} parent=1 // pred_check_branch
      %34 = sbr.rel (0) target = $region17
    $region16: #{actor_forward.1} parent=1 // pred_region
      %s36 = ssub.s32 4096, 4096
      %37 = vsyncadd [#allocation5], %s36
      %s38 = sshll.u32 [#allocation4], 4
      %s39 = int_to_ptr.vmem [resolvable:$true] %s38
      %44 = dma.hbm_to_vmem [thread:$0]  %s3, 4096, %s39, [#allocation5], 128, 128, 8
    $region17: #{actor_forward.1} parent=1 // pred_fallthru
      _
    // Predicated region
    $region18: #{actor_forward.1} parent=1 // pred_check
      _
    $region19: #{actor_forward.1} parent=1 // pred_check_branch
      %46 = sbr.rel (0) target = $region21
    $region20: #{actor_forward.1} parent=1 // pred_region
      _
    $region21: #{actor_forward.1} parent=1 // pred_fallthru
      _
    // Predicated region
    $region22: #{actor_forward.1} parent=1 // pred_check
      _
    $region23: #{actor_forward.1} parent=1 // pred_check_branch
      %48 = sbr.rel (0) target = $region25
    $region24: #{actor_forward.1} parent=1 // pred_region
      %s50 = ssub.s32 4096, 4096
      %51 = vsyncadd [#allocation5], %s50
      %s52 = sshll.u32 [#allocation6], 4
      %s53 = int_to_ptr.vmem [resolvable:$true] %s52
      %58 = dma.hbm_to_vmem [thread:$0]  %s5, 4096, %s53, [#allocation5], 128, 128, 8
    $region25: #{actor_forward.1} parent=1 // pred_fallthru
      _
    // Predicated region
    $region26: #{actor_forward.1} parent=1 // pred_check
      _
    $region27: #{actor_forward.1} parent=1 // pred_check_branch
      %60 = sbr.rel (0) target = $region29
    $region28: #{actor_forward.1} parent=1 // pred_region
      _
    $region29: #{actor_forward.1} parent=1 // pred_fallthru
      _
    // Predicated region
    $region30: #{actor_forward.1} parent=1 // pred_check
      _
    $region31: #{actor_forward.1} parent=1 // pred_check_branch
      %62 = sbr.rel (0) target = $region33
    $region32: #{actor_forward.1} parent=1 // pred_region
      %s64 = ssub.s32 2048, 2048
      %65 = vsyncadd [#allocation8], %s64
      %s66 = sshll.u32 [#allocation7], 4
      %s67 = int_to_ptr.vmem [resolvable:$true] %s66
      %72 = dma.hbm_to_vmem [thread:$0]  %s7, 2048, %s67, [#allocation8], 64, 64, 4
    $region33: #{actor_forward.1} parent=1 // pred_fallthru
      _
    // Predicated region
    $region34: #{actor_forward.1} parent=1 // pred_check
      _
    $region35: #{actor_forward.1} parent=1 // pred_check_branch
      %74 = sbr.rel (0) target = $region37
    $region36: #{actor_forward.1} parent=1 // pred_region
      _
    $region37: #{actor_forward.1} parent=1 // pred_fallthru
      _
    // Predicated region
    $region38: #{actor_forward.1} parent=1 // pred_check
      _
    $region39: #{actor_forward.1} parent=1 // pred_check_branch
      %76 = sbr.rel (0) target = $region41
    $region40: #{actor_forward.1} parent=1 // pred_region
      %77 = dma.done [#allocation3], 256
    $region41: #{actor_forward.1} parent=1 // pred_fallthru
      _
    // Predicated region
    $region42: #{actor_forward.1} parent=1 // pred_check
      _
    $region43: #{actor_forward.1} parent=1 // pred_check_branch
      %79 = sbr.rel (0) target = $region45
    $region44: #{actor_forward.1} parent=1 // pred_region
      %80 = dma.done [#allocation5], 4096
    $region45: #{actor_forward.1} parent=1 // pred_fallthru
      _
    // Predicated region
    $region46: #{actor_forward.1} parent=1 // pred_check
      _
    $region47: #{actor_forward.1} parent=1 // pred_check_branch
      %82 = sbr.rel (0) target = $region49
    $region48: #{actor_forward.1} parent=1 // pred_region
      %83 = dma.done [#allocation5], 4096
    $region49: #{actor_forward.1} parent=1 // pred_fallthru
      _
    // Predicated region
    $region50: #{actor_forward.1} parent=1 // pred_check
      _
    $region51: #{actor_forward.1} parent=1 // pred_check_branch
      %85 = sbr.rel (0) target = $region53
    $region52: #{actor_forward.1} parent=1 // pred_region
      %86 = dma.done [#allocation8], 2048
    $region53: #{actor_forward.1} parent=1 // pred_fallthru
      _
    %v88 = vld [vmem:[%s0] sm:$0xff]
    %v89 = vpack.c.bf16 %v88, %v88
    %v90 = vld [vmem:[#allocation2] sm:$0xff]
    %v91 = vld [vmem:[#allocation2 + $0x8] sm:$0xff]
    %v92 = vld [vmem:[%s2] sm:$0x3]
    %v94 = vlaneseq
    %v95 = vshrl.u32 %v94, 7
    %v96 = vsub.s32 0, %v95
    %v97 = vrot.slane %v92, %v96
    %v98 = vlaneseq
    %v99 = vshrl.u32 %v98, 7
    %v100 = vsub.s32 1, %v99
    %v101 = vrot.slane %v92, %v100
    %v106 = vunpack.c.l.b16 %v90
    %v107 = vunpack.c.h.b16 %v90
    %v108 = vunpack.c.l.b16 %v91
    %v109 = vunpack.c.h.b16 %v91
    %v110 = vpack.c.b16 %v108, %v106
    %v111 = vpack.c.b16 %v109, %v107
    %vm114 = vcmask 130048
    %v116 = vsel %vm114, %v89, 0
    %118 = vmatprep.subr.bf16.mxu0 0
    %119 = vmatpush1.bf16.msra.mxu0 0
    %120 = vmatprep.subr.bf16.mxu0 0
    %121 = vmatpush1.bf16.msra.mxu0 0
    %122 = vmatprep.subr.bf16.mxu0 0
    %123 = vmatpush1.bf16.msra.mxu0 0
    %124 = vmatprep.subr.bf16.mxu0 0
    %125 = vmatpush1.bf16.msra.mxu0 0
    %126 = vmatprep.subr.bf16.mxu0 0
    %127 = vmatpush1.bf16.msra.mxu0 0
    %128 = vmatprep.subr.bf16.mxu0 0
    %129 = vmatpush1.bf16.msra.mxu0 0
    %130 = vmatprep.subr.bf16.mxu0 0
    %131 = vmatpush1.bf16.msra.mxu0 0
    %132 = vmatprep.subr.bf16.mxu0 %v111
    %133 = vmatpush1.bf16.msra.mxu0 %v110
    %134 = vmatprep.subr.bf16.mxu0 0
    %135 = vmatpush2.bf16.msra.mxu0 0
    %136 = vmatprep.subr.bf16.mxu0 0
    %137 = vmatpush2.bf16.msra.mxu0 0
    %138 = vmatprep.subr.bf16.mxu0 0
    %139 = vmatpush2.bf16.msra.mxu0 0
    %140 = vmatprep.subr.bf16.mxu0 0
    %141 = vmatpush2.bf16.msra.mxu0 0
    %142 = vmatprep.subr.bf16.mxu0 0
    %143 = vmatpush2.bf16.msra.mxu0 0
    %144 = vmatprep.subr.bf16.mxu0 0
    %145 = vmatpush2.bf16.msra.mxu0 0
    %146 = vmatprep.subr.bf16.mxu0 0
    %147 = vmatpush2.bf16.msra.mxu0 0
    %148 = vmatprep.subr.bf16.mxu0 0
    %149 = vmatpush2.bf16.msra.mxu0 0
    %150 = vmatprep.mubr.bf16.mxu0 0
    %151 = vmatmul.mubr.bf16.gmra.mxu0 %v116
    %v152 = vpop.f32.mrf.mxu0
    %v153 = vadd.f32 %v97, %v152
    %v154 = vpop.f32.mrf.mxu0
    %v155 = vadd.f32 %v101, %v154
    %v156 = vpop.f32.mrf.mxu0
    %v157 = vpop.f32.mrf.mxu0
    %158 = vdwg.mxu0
    %vm159 = vcmp.gt.f32.partialorder %v153, 0.0
    %vm160 = vcmp.gt.f32.partialorder %v155, 0.0
    %v161 = vmul.f32 %v153, 0.01
    %v162 = vmul.f32 %v155, 0.01
    %v163 = vsel %vm159, %v153, %v161
    %v164 = vsel %vm160, %v155, %v162
    %v165 = vpack.c.bf16 %v163, %v163
    %v166 = vpack.c.bf16 %v164, %v164
    %v167 = vld [vmem:[#allocation4] sm:$0xff]
    %v168 = vld [vmem:[#allocation4 + $0x8] sm:$0xff]
    %v169 = vld [vmem:[#allocation4 + $0x10] sm:$0xff]
    %v170 = vld [vmem:[#allocation4 + $0x18] sm:$0xff]
    %v171 = vld [vmem:[#allocation4 + $0x20] sm:$0xff]
    %v172 = vld [vmem:[#allocation4 + $0x28] sm:$0xff]
    %v173 = vld [vmem:[#allocation4 + $0x30] sm:$0xff]
    %v174 = vld [vmem:[#allocation4 + $0x38] sm:$0xff]
    %v175 = vld [vmem:[#allocation4 + $0x40] sm:$0xff]
    %v176 = vld [vmem:[#allocation4 + $0x48] sm:$0xff]
    %v177 = vld [vmem:[#allocation4 + $0x50] sm:$0xff]
    %v178 = vld [vmem:[#allocation4 + $0x58] sm:$0xff]
    %v179 = vld [vmem:[#allocation4 + $0x60] sm:$0xff]
    %v180 = vld [vmem:[#allocation4 + $0x68] sm:$0xff]
    %v181 = vld [vmem:[#allocation4 + $0x70] sm:$0xff]
    %v182 = vld [vmem:[#allocation4 + $0x78] sm:$0xff]
    %v183 = vld [vmem:[#allocation4 + $0x80] sm:$0xff]
    %v184 = vld [vmem:[#allocation4 + $0x88] sm:$0xff]
    %v185 = vld [vmem:[#allocation4 + $0x90] sm:$0xff]
    %v186 = vld [vmem:[#allocation4 + $0x98] sm:$0xff]
    %v187 = vld [vmem:[#allocation4 + $0xa0] sm:$0xff]
    %v188 = vld [vmem:[#allocation4 + $0xa8] sm:$0xff]
    %v189 = vld [vmem:[#allocation4 + $0xb0] sm:$0xff]
    %v190 = vld [vmem:[#allocation4 + $0xb8] sm:$0xff]
    %v191 = vld [vmem:[#allocation4 + $0xc0] sm:$0xff]
    %v192 = vld [vmem:[#allocation4 + $0xc8] sm:$0xff]
    %v193 = vld [vmem:[#allocation4 + $0xd0] sm:$0xff]
    %v194 = vld [vmem:[#allocation4 + $0xd8] sm:$0xff]
    %v195 = vld [vmem:[#allocation4 + $0xe0] sm:$0xff]
    %v196 = vld [vmem:[#allocation4 + $0xe8] sm:$0xff]
    %v197 = vld [vmem:[#allocation4 + $0xf0] sm:$0xff]
    %v198 = vld [vmem:[#allocation4 + $0xf8] sm:$0xff]
    %v199 = vld [vmem:[%s4] sm:$0x3]
    %v201 = vlaneseq
    %v202 = vshrl.u32 %v201, 7
    %v203 = vsub.s32 0, %v202
    %v204 = vrot.slane %v199, %v203
    %v205 = vlaneseq
    %v206 = vshrl.u32 %v205, 7
    %v207 = vsub.s32 1, %v206
    %v208 = vrot.slane %v199, %v207
    %v243 = vunpack.c.l.b16 %v167
    %v244 = vunpack.c.h.b16 %v167
    %v245 = vunpack.c.l.b16 %v168
    %v246 = vunpack.c.h.b16 %v168
    %v247 = vunpack.c.l.b16 %v169
    %v248 = vunpack.c.h.b16 %v169
    %v249 = vunpack.c.l.b16 %v170
    %v250 = vunpack.c.h.b16 %v170
    %v251 = vunpack.c.l.b16 %v171
    %v252 = vunpack.c.h.b16 %v171
    %v253 = vunpack.c.l.b16 %v172
    %v254 = vunpack.c.h.b16 %v172
    %v255 = vunpack.c.l.b16 %v173
    %v256 = vunpack.c.h.b16 %v173
    %v257 = vunpack.c.l.b16 %v174
    %v258 = vunpack.c.h.b16 %v174
    %v259 = vunpack.c.l.b16 %v175
    %v260 = vunpack.c.h.b16 %v175
    %v261 = vunpack.c.l.b16 %v176
    %v262 = vunpack.c.h.b16 %v176
    %v263 = vunpack.c.l.b16 %v177
    %v264 = vunpack.c.h.b16 %v177
    %v265 = vunpack.c.l.b16 %v178
    %v266 = vunpack.c.h.b16 %v178
    %v267 = vunpack.c.l.b16 %v179
    %v268 = vunpack.c.h.b16 %v179
    %v269 = vunpack.c.l.b16 %v180
    %v270 = vunpack.c.h.b16 %v180
    %v271 = vunpack.c.l.b16 %v181
    %v272 = vunpack.c.h.b16 %v181
    %v273 = vunpack.c.l.b16 %v182
    %v274 = vunpack.c.h.b16 %v182
    %v275 = vunpack.c.l.b16 %v183
    %v276 = vunpack.c.h.b16 %v183
    %v277 = vunpack.c.l.b16 %v184
    %v278 = vunpack.c.h.b16 %v184
    %v279 = vunpack.c.l.b16 %v185
    %v280 = vunpack.c.h.b16 %v185
    %v281 = vunpack.c.l.b16 %v186
    %v282 = vunpack.c.h.b16 %v186
    %v283 = vunpack.c.l.b16 %v187
    %v284 = vunpack.c.h.b16 %v187
    %v285 = vunpack.c.l.b16 %v188
    %v286 = vunpack.c.h.b16 %v188
    %v287 = vunpack.c.l.b16 %v189
    %v288 = vunpack.c.h.b16 %v189
    %v289 = vunpack.c.l.b16 %v190
    %v290 = vunpack.c.h.b16 %v190
    %v291 = vunpack.c.l.b16 %v191
    %v292 = vunpack.c.h.b16 %v191
    %v293 = vunpack.c.l.b16 %v192
    %v294 = vunpack.c.h.b16 %v192
    %v295 = vunpack.c.l.b16 %v193
    %v296 = vunpack.c.h.b16 %v193
    %v297 = vunpack.c.l.b16 %v194
    %v298 = vunpack.c.h.b16 %v194
    %v299 = vunpack.c.l.b16 %v195
    %v300 = vunpack.c.h.b16 %v195
    %v301 = vunpack.c.l.b16 %v196
    %v302 = vunpack.c.h.b16 %v196
    %v303 = vunpack.c.l.b16 %v197
    %v304 = vunpack.c.h.b16 %v197
    %v305 = vunpack.c.l.b16 %v198
    %v306 = vunpack.c.h.b16 %v198
    %v307 = vpack.c.b16 %v245, %v243
    %v308 = vpack.c.b16 %v246, %v244
    %v309 = vpack.c.b16 %v249, %v247
    %v310 = vpack.c.b16 %v250, %v248
    %v311 = vpack.c.b16 %v253, %v251
    %v312 = vpack.c.b16 %v254, %v252
    %v313 = vpack.c.b16 %v257, %v255
    %v314 = vpack.c.b16 %v258, %v256
    %v315 = vpack.c.b16 %v261, %v259
    %v316 = vpack.c.b16 %v262, %v260
    %v317 = vpack.c.b16 %v265, %v263
    %v318 = vpack.c.b16 %v266, %v264
    %v319 = vpack.c.b16 %v269, %v267
    %v320 = vpack.c.b16 %v270, %v268
    %v321 = vpack.c.b16 %v273, %v271
    %v322 = vpack.c.b16 %v274, %v272
    %v323 = vpack.c.b16 %v277, %v275
    %v324 = vpack.c.b16 %v278, %v276
    %v325 = vpack.c.b16 %v281, %v279
    %v326 = vpack.c.b16 %v282, %v280
    %v327 = vpack.c.b16 %v285, %v283
    %v328 = vpack.c.b16 %v286, %v284
    %v329 = vpack.c.b16 %v289, %v287
    %v330 = vpack.c.b16 %v290, %v288
    %v331 = vpack.c.b16 %v293, %v291
    %v332 = vpack.c.b16 %v294, %v292
    %v333 = vpack.c.b16 %v297, %v295
    %v334 = vpack.c.b16 %v298, %v296
    %v335 = vpack.c.b16 %v301, %v299
    %v336 = vpack.c.b16 %v302, %v300
    %v337 = vpack.c.b16 %v305, %v303
    %v338 = vpack.c.b16 %v306, %v304
    %371 = vmatprep.subr.bf16.mxu0 %v322
    %372 = vmatpush1.bf16.msra.mxu0 %v321
    %373 = vmatprep.subr.bf16.mxu0 %v320
    %374 = vmatpush1.bf16.msra.mxu0 %v319
    %375 = vmatprep.subr.bf16.mxu0 %v318
    %376 = vmatpush1.bf16.msra.mxu0 %v317
    %377 = vmatprep.subr.bf16.mxu0 %v316
    %378 = vmatpush1.bf16.msra.mxu0 %v315
    %379 = vmatprep.subr.bf16.mxu0 %v314
    %380 = vmatpush1.bf16.msra.mxu0 %v313
    %381 = vmatprep.subr.bf16.mxu0 %v312
    %382 = vmatpush1.bf16.msra.mxu0 %v311
    %383 = vmatprep.subr.bf16.mxu0 %v310
    %384 = vmatpush1.bf16.msra.mxu0 %v309
    %385 = vmatprep.subr.bf16.mxu0 %v308
    %386 = vmatpush1.bf16.msra.mxu0 %v307
    %387 = vmatprep.subr.bf16.mxu0 %v338
    %388 = vmatpush2.bf16.msra.mxu0 %v337
    %389 = vmatprep.subr.bf16.mxu0 %v336
    %390 = vmatpush2.bf16.msra.mxu0 %v335
    %391 = vmatprep.subr.bf16.mxu0 %v334
    %392 = vmatpush2.bf16.msra.mxu0 %v333
    %393 = vmatprep.subr.bf16.mxu0 %v332
    %394 = vmatpush2.bf16.msra.mxu0 %v331
    %395 = vmatprep.subr.bf16.mxu0 %v330
    %396 = vmatpush2.bf16.msra.mxu0 %v329
    %397 = vmatprep.subr.bf16.mxu0 %v328
    %398 = vmatpush2.bf16.msra.mxu0 %v327
    %399 = vmatprep.subr.bf16.mxu0 %v326
    %400 = vmatpush2.bf16.msra.mxu0 %v325
    %401 = vmatprep.subr.bf16.mxu0 %v324
    %402 = vmatpush2.bf16.msra.mxu0 %v323
    %403 = vmatprep.mubr.bf16.mxu0 %v166
    %404 = vmatmul.mubr.bf16.gmra.mxu0 %v165
    %v405 = vpop.f32.mrf.mxu0
    %v406 = vadd.f32 %v204, %v405
    %v407 = vpop.f32.mrf.mxu0
    %v408 = vadd.f32 %v208, %v407
    %v409 = vpop.f32.mrf.mxu0
    %v410 = vpop.f32.mrf.mxu0
    %411 = vdwg.mxu0
    %vm412 = vcmp.gt.f32.partialorder %v406, 0.0
    %vm413 = vcmp.gt.f32.partialorder %v408, 0.0
    %v414 = vmul.f32 %v406, 0.01
    %v415 = vmul.f32 %v408, 0.01
    %v416 = vsel %vm412, %v406, %v414
    %v417 = vsel %vm413, %v408, %v415
    %v418 = vpack.c.bf16 %v416, %v416
    %v419 = vpack.c.bf16 %v417, %v417
    %v420 = vld [vmem:[#allocation6] sm:$0xff]
    %v421 = vld [vmem:[#allocation6 + $0x8] sm:$0xff]
    %v422 = vld [vmem:[#allocation6 + $0x10] sm:$0xff]
    %v423 = vld [vmem:[#allocation6 + $0x18] sm:$0xff]
    %v424 = vld [vmem:[#allocation6 + $0x20] sm:$0xff]
    %v425 = vld [vmem:[#allocation6 + $0x28] sm:$0xff]
    %v426 = vld [vmem:[#allocation6 + $0x30] sm:$0xff]
    %v427 = vld [vmem:[#allocation6 + $0x38] sm:$0xff]
    %v428 = vld [vmem:[#allocation6 + $0x40] sm:$0xff]
    %v429 = vld [vmem:[#allocation6 + $0x48] sm:$0xff]
    %v430 = vld [vmem:[#allocation6 + $0x50] sm:$0xff]
    %v431 = vld [vmem:[#allocation6 + $0x58] sm:$0xff]
    %v432 = vld [vmem:[#allocation6 + $0x60] sm:$0xff]
    %v433 = vld [vmem:[#allocation6 + $0x68] sm:$0xff]
    %v434 = vld [vmem:[#allocation6 + $0x70] sm:$0xff]
    %v435 = vld [vmem:[#allocation6 + $0x78] sm:$0xff]
    %v436 = vld [vmem:[#allocation6 + $0x80] sm:$0xff]
    %v437 = vld [vmem:[#allocation6 + $0x88] sm:$0xff]
    %v438 = vld [vmem:[#allocation6 + $0x90] sm:$0xff]
    %v439 = vld [vmem:[#allocation6 + $0x98] sm:$0xff]
    %v440 = vld [vmem:[#allocation6 + $0xa0] sm:$0xff]
    %v441 = vld [vmem:[#allocation6 + $0xa8] sm:$0xff]
    %v442 = vld [vmem:[#allocation6 + $0xb0] sm:$0xff]
    %v443 = vld [vmem:[#allocation6 + $0xb8] sm:$0xff]
    %v444 = vld [vmem:[#allocation6 + $0xc0] sm:$0xff]
    %v445 = vld [vmem:[#allocation6 + $0xc8] sm:$0xff]
    %v446 = vld [vmem:[#allocation6 + $0xd0] sm:$0xff]
    %v447 = vld [vmem:[#allocation6 + $0xd8] sm:$0xff]
    %v448 = vld [vmem:[#allocation6 + $0xe0] sm:$0xff]
    %v449 = vld [vmem:[#allocation6 + $0xe8] sm:$0xff]
    %v450 = vld [vmem:[#allocation6 + $0xf0] sm:$0xff]
    %v451 = vld [vmem:[#allocation6 + $0xf8] sm:$0xff]
    %v452 = vld [vmem:[%s6] sm:$0x3]
    %v454 = vlaneseq
    %v455 = vshrl.u32 %v454, 7
    %v456 = vsub.s32 0, %v455
    %v457 = vrot.slane %v452, %v456
    %v458 = vlaneseq
    %v459 = vshrl.u32 %v458, 7
    %v460 = vsub.s32 1, %v459
    %v461 = vrot.slane %v452, %v460
    %v496 = vunpack.c.l.b16 %v420
    %v497 = vunpack.c.h.b16 %v420
    %v498 = vunpack.c.l.b16 %v421
    %v499 = vunpack.c.h.b16 %v421
    %v500 = vunpack.c.l.b16 %v422
    %v501 = vunpack.c.h.b16 %v422
    %v502 = vunpack.c.l.b16 %v423
    %v503 = vunpack.c.h.b16 %v423
    %v504 = vunpack.c.l.b16 %v424
    %v505 = vunpack.c.h.b16 %v424
    %v506 = vunpack.c.l.b16 %v425
    %v507 = vunpack.c.h.b16 %v425
    %v508 = vunpack.c.l.b16 %v426
    %v509 = vunpack.c.h.b16 %v426
    %v510 = vunpack.c.l.b16 %v427
    %v511 = vunpack.c.h.b16 %v427
    %v512 = vunpack.c.l.b16 %v428
    %v513 = vunpack.c.h.b16 %v428
    %v514 = vunpack.c.l.b16 %v429
    %v515 = vunpack.c.h.b16 %v429
    %v516 = vunpack.c.l.b16 %v430
    %v517 = vunpack.c.h.b16 %v430
    %v518 = vunpack.c.l.b16 %v431
    %v519 = vunpack.c.h.b16 %v431
    %v520 = vunpack.c.l.b16 %v432
    %v521 = vunpack.c.h.b16 %v432
    %v522 = vunpack.c.l.b16 %v433
    %v523 = vunpack.c.h.b16 %v433
    %v524 = vunpack.c.l.b16 %v434
    %v525 = vunpack.c.h.b16 %v434
    %v526 = vunpack.c.l.b16 %v435
    %v527 = vunpack.c.h.b16 %v435
    %v528 = vunpack.c.l.b16 %v436
    %v529 = vunpack.c.h.b16 %v436
    %v530 = vunpack.c.l.b16 %v437
    %v531 = vunpack.c.h.b16 %v437
    %v532 = vunpack.c.l.b16 %v438
    %v533 = vunpack.c.h.b16 %v438
    %v534 = vunpack.c.l.b16 %v439
    %v535 = vunpack.c.h.b16 %v439
    %v536 = vunpack.c.l.b16 %v440
    %v537 = vunpack.c.h.b16 %v440
    %v538 = vunpack.c.l.b16 %v441
    %v539 = vunpack.c.h.b16 %v441
    %v540 = vunpack.c.l.b16 %v442
    %v541 = vunpack.c.h.b16 %v442
    %v542 = vunpack.c.l.b16 %v443
    %v543 = vunpack.c.h.b16 %v443
    %v544 = vunpack.c.l.b16 %v444
    %v545 = vunpack.c.h.b16 %v444
    %v546 = vunpack.c.l.b16 %v445
    %v547 = vunpack.c.h.b16 %v445
    %v548 = vunpack.c.l.b16 %v446
    %v549 = vunpack.c.h.b16 %v446
    %v550 = vunpack.c.l.b16 %v447
    %v551 = vunpack.c.h.b16 %v447
    %v552 = vunpack.c.l.b16 %v448
    %v553 = vunpack.c.h.b16 %v448
    %v554 = vunpack.c.l.b16 %v449
    %v555 = vunpack.c.h.b16 %v449
    %v556 = vunpack.c.l.b16 %v450
    %v557 = vunpack.c.h.b16 %v450
    %v558 = vunpack.c.l.b16 %v451
    %v559 = vunpack.c.h.b16 %v451
    %v560 = vpack.c.b16 %v498, %v496
    %v561 = vpack.c.b16 %v499, %v497
    %v562 = vpack.c.b16 %v502, %v500
    %v563 = vpack.c.b16 %v503, %v501
    %v564 = vpack.c.b16 %v506, %v504
    %v565 = vpack.c.b16 %v507, %v505
    %v566 = vpack.c.b16 %v510, %v508
    %v567 = vpack.c.b16 %v511, %v509
    %v568 = vpack.c.b16 %v514, %v512
    %v569 = vpack.c.b16 %v515, %v513
    %v570 = vpack.c.b16 %v518, %v516
    %v571 = vpack.c.b16 %v519, %v517
    %v572 = vpack.c.b16 %v522, %v520
    %v573 = vpack.c.b16 %v523, %v521
    %v574 = vpack.c.b16 %v526, %v524
    %v575 = vpack.c.b16 %v527, %v525
    %v576 = vpack.c.b16 %v530, %v528
    %v577 = vpack.c.b16 %v531, %v529
    %v578 = vpack.c.b16 %v534, %v532
    %v579 = vpack.c.b16 %v535, %v533
    %v580 = vpack.c.b16 %v538, %v536
    %v581 = vpack.c.b16 %v539, %v537
    %v582 = vpack.c.b16 %v542, %v540
    %v583 = vpack.c.b16 %v543, %v541
    %v584 = vpack.c.b16 %v546, %v544
    %v585 = vpack.c.b16 %v547, %v545
    %v586 = vpack.c.b16 %v550, %v548
    %v587 = vpack.c.b16 %v551, %v549
    %v588 = vpack.c.b16 %v554, %v552
    %v589 = vpack.c.b16 %v555, %v553
    %v590 = vpack.c.b16 %v558, %v556
    %v591 = vpack.c.b16 %v559, %v557
    %624 = vmatprep.subr.bf16.mxu0 %v575
    %625 = vmatpush1.bf16.msra.mxu0 %v574
    %626 = vmatprep.subr.bf16.mxu0 %v573
    %627 = vmatpush1.bf16.msra.mxu0 %v572
    %628 = vmatprep.subr.bf16.mxu0 %v571
    %629 = vmatpush1.bf16.msra.mxu0 %v570
    %630 = vmatprep.subr.bf16.mxu0 %v569
    %631 = vmatpush1.bf16.msra.mxu0 %v568
    %632 = vmatprep.subr.bf16.mxu0 %v567
    %633 = vmatpush1.bf16.msra.mxu0 %v566
    %634 = vmatprep.subr.bf16.mxu0 %v565
    %635 = vmatpush1.bf16.msra.mxu0 %v564
    %636 = vmatprep.subr.bf16.mxu0 %v563
    %637 = vmatpush1.bf16.msra.mxu0 %v562
    %638 = vmatprep.subr.bf16.mxu0 %v561
    %639 = vmatpush1.bf16.msra.mxu0 %v560
    %640 = vmatprep.subr.bf16.mxu0 %v591
    %641 = vmatpush2.bf16.msra.mxu0 %v590
    %642 = vmatprep.subr.bf16.mxu0 %v589
    %643 = vmatpush2.bf16.msra.mxu0 %v588
    %644 = vmatprep.subr.bf16.mxu0 %v587
    %645 = vmatpush2.bf16.msra.mxu0 %v586
    %646 = vmatprep.subr.bf16.mxu0 %v585
    %647 = vmatpush2.bf16.msra.mxu0 %v584
    %648 = vmatprep.subr.bf16.mxu0 %v583
    %649 = vmatpush2.bf16.msra.mxu0 %v582
    %650 = vmatprep.subr.bf16.mxu0 %v581
    %651 = vmatpush2.bf16.msra.mxu0 %v580
    %652 = vmatprep.subr.bf16.mxu0 %v579
    %653 = vmatpush2.bf16.msra.mxu0 %v578
    %654 = vmatprep.subr.bf16.mxu0 %v577
    %655 = vmatpush2.bf16.msra.mxu0 %v576
    %656 = vmatprep.mubr.bf16.mxu0 %v419
    %657 = vmatmul.mubr.bf16.gmra.mxu0 %v418
    %v658 = vpop.f32.mrf.mxu0
    %v659 = vadd.f32 %v457, %v658
    %v660 = vpop.f32.mrf.mxu0
    %v661 = vadd.f32 %v461, %v660
    %v662 = vpop.f32.mrf.mxu0
    %v663 = vpop.f32.mrf.mxu0
    %664 = vdwg.mxu0
    %vm665 = vcmp.gt.f32.partialorder %v659, 0.0
    %vm666 = vcmp.gt.f32.partialorder %v661, 0.0
    %v667 = vmul.f32 %v659, 0.3
    %v668 = vmul.f32 %v661, 0.3
    %v669 = vsel %vm665, %v659, %v667
    %v670 = vsel %vm666, %v661, %v668
    %v671 = vpack.c.bf16 %v669, %v669
    %v672 = vpack.c.bf16 %v670, %v670
    %v673 = vld [vmem:[#allocation7] sm:$0xf]
    %v674 = vld [vmem:[#allocation7 + $0x4] sm:$0xf]
    %v675 = vld [vmem:[#allocation7 + $0x8] sm:$0xf]
    %v676 = vld [vmem:[#allocation7 + $0xc] sm:$0xf]
    %v677 = vld [vmem:[#allocation7 + $0x10] sm:$0xf]
    %v678 = vld [vmem:[#allocation7 + $0x14] sm:$0xf]
    %v679 = vld [vmem:[#allocation7 + $0x18] sm:$0xf]
    %v680 = vld [vmem:[#allocation7 + $0x1c] sm:$0xf]
    %v681 = vld [vmem:[#allocation7 + $0x20] sm:$0xf]
    %v682 = vld [vmem:[#allocation7 + $0x24] sm:$0xf]
    %v683 = vld [vmem:[#allocation7 + $0x28] sm:$0xf]
    %v684 = vld [vmem:[#allocation7 + $0x2c] sm:$0xf]
    %v685 = vld [vmem:[#allocation7 + $0x30] sm:$0xf]
    %v686 = vld [vmem:[#allocation7 + $0x34] sm:$0xf]
    %v687 = vld [vmem:[#allocation7 + $0x38] sm:$0xf]
    %v688 = vld [vmem:[#allocation7 + $0x3c] sm:$0xf]
    %v689 = vld [vmem:[#allocation7 + $0x40] sm:$0xf]
    %v690 = vld [vmem:[#allocation7 + $0x44] sm:$0xf]
    %v691 = vld [vmem:[#allocation7 + $0x48] sm:$0xf]
    %v692 = vld [vmem:[#allocation7 + $0x4c] sm:$0xf]
    %v693 = vld [vmem:[#allocation7 + $0x50] sm:$0xf]
    %v694 = vld [vmem:[#allocation7 + $0x54] sm:$0xf]
    %v695 = vld [vmem:[#allocation7 + $0x58] sm:$0xf]
    %v696 = vld [vmem:[#allocation7 + $0x5c] sm:$0xf]
    %v697 = vld [vmem:[#allocation7 + $0x60] sm:$0xf]
    %v698 = vld [vmem:[#allocation7 + $0x64] sm:$0xf]
    %v699 = vld [vmem:[#allocation7 + $0x68] sm:$0xf]
    %v700 = vld [vmem:[#allocation7 + $0x6c] sm:$0xf]
    %v701 = vld [vmem:[#allocation7 + $0x70] sm:$0xf]
    %v702 = vld [vmem:[#allocation7 + $0x74] sm:$0xf]
    %v703 = vld [vmem:[#allocation7 + $0x78] sm:$0xf]
    %v704 = vld [vmem:[#allocation7 + $0x7c] sm:$0xf]
    %v705 = vld [vmem:[%s8] sm:$0x1]
    %v707 = vlaneseq
    %v708 = vshrl.u32 %v707, 7
    %v709 = vsub.s32 0, %v708
    %v710 = vrot.slane %v705, %v709
    %v744 = vunpack.c.l.b16 %v673
    %v745 = vunpack.c.l.b16 %v674
    %v746 = vunpack.c.l.b16 %v675
    %v747 = vunpack.c.l.b16 %v676
    %v748 = vunpack.c.l.b16 %v677
    %v749 = vunpack.c.l.b16 %v678
    %v750 = vunpack.c.l.b16 %v679
    %v751 = vunpack.c.l.b16 %v680
    %v752 = vunpack.c.l.b16 %v681
    %v753 = vunpack.c.l.b16 %v682
    %v754 = vunpack.c.l.b16 %v683
    %v755 = vunpack.c.l.b16 %v684
    %v756 = vunpack.c.l.b16 %v685
    %v757 = vunpack.c.l.b16 %v686
    %v758 = vunpack.c.l.b16 %v687
    %v759 = vunpack.c.l.b16 %v688
    %v760 = vunpack.c.l.b16 %v689
    %v761 = vunpack.c.l.b16 %v690
    %v762 = vunpack.c.l.b16 %v691
    %v763 = vunpack.c.l.b16 %v692
    %v764 = vunpack.c.l.b16 %v693
    %v765 = vunpack.c.l.b16 %v694
    %v766 = vunpack.c.l.b16 %v695
    %v767 = vunpack.c.l.b16 %v696
    %v768 = vunpack.c.l.b16 %v697
    %v769 = vunpack.c.l.b16 %v698
    %v770 = vunpack.c.l.b16 %v699
    %v771 = vunpack.c.l.b16 %v700
    %v772 = vunpack.c.l.b16 %v701
    %v773 = vunpack.c.l.b16 %v702
    %v774 = vunpack.c.l.b16 %v703
    %v775 = vunpack.c.l.b16 %v704
    %v776 = vpack.c.b16 %v745, %v744
    %v777 = vpack.c.b16 %v747, %v746
    %v778 = vpack.c.b16 %v749, %v748
    %v779 = vpack.c.b16 %v751, %v750
    %v780 = vpack.c.b16 %v753, %v752
    %v781 = vpack.c.b16 %v755, %v754
    %v782 = vpack.c.b16 %v757, %v756
    %v783 = vpack.c.b16 %v759, %v758
    %v784 = vpack.c.b16 %v761, %v760
    %v785 = vpack.c.b16 %v763, %v762
    %v786 = vpack.c.b16 %v765, %v764
    %v787 = vpack.c.b16 %v767, %v766
    %v788 = vpack.c.b16 %v769, %v768
    %v789 = vpack.c.b16 %v771, %v770
    %v790 = vpack.c.b16 %v773, %v772
    %v791 = vpack.c.b16 %v775, %v774
    %808 = vmatprep.subr.bf16.mxu0 0
    %809 = vmatpush1.bf16.msra.mxu0 %v783
    %810 = vmatprep.subr.bf16.mxu0 0
    %811 = vmatpush1.bf16.msra.mxu0 %v782
    %812 = vmatprep.subr.bf16.mxu0 0
    %813 = vmatpush1.bf16.msra.mxu0 %v781
    %814 = vmatprep.subr.bf16.mxu0 0
    %815 = vmatpush1.bf16.msra.mxu0 %v780
    %816 = vmatprep.subr.bf16.mxu0 0
    %817 = vmatpush1.bf16.msra.mxu0 %v779
    %818 = vmatprep.subr.bf16.mxu0 0
    %819 = vmatpush1.bf16.msra.mxu0 %v778
    %820 = vmatprep.subr.bf16.mxu0 0
    %821 = vmatpush1.bf16.msra.mxu0 %v777
    %822 = vmatprep.subr.bf16.mxu0 0
    %823 = vmatpush1.bf16.msra.mxu0 %v776
    %824 = vmatprep.subr.bf16.mxu0 0
    %825 = vmatpush2.bf16.msra.mxu0 %v791
    %826 = vmatprep.subr.bf16.mxu0 0
    %827 = vmatpush2.bf16.msra.mxu0 %v790
    %828 = vmatprep.subr.bf16.mxu0 0
    %829 = vmatpush2.bf16.msra.mxu0 %v789
    %830 = vmatprep.subr.bf16.mxu0 0
    %831 = vmatpush2.bf16.msra.mxu0 %v788
    %832 = vmatprep.subr.bf16.mxu0 0
    %833 = vmatpush2.bf16.msra.mxu0 %v787
    %834 = vmatprep.subr.bf16.mxu0 0
    %835 = vmatpush2.bf16.msra.mxu0 %v786
    %836 = vmatprep.subr.bf16.mxu0 0
    %837 = vmatpush2.bf16.msra.mxu0 %v785
    %838 = vmatprep.subr.bf16.mxu0 0
    %839 = vmatpush2.bf16.msra.mxu0 %v784
    %840 = vmatprep.mubr.bf16.mxu0 %v672
    %841 = vmatmul.mubr.bf16.gmra.mxu0 %v671
    %v842 = vpop.f32.mrf.mxu0
    %v843 = vadd.f32 %v710, %v842
    %v844 = vpop.f32.mrf.mxu0
    %v845 = vpop.f32.mrf.mxu0
    %v846 = vpop.f32.mrf.mxu0
    %847 = vdwg.mxu0
    %848 = vst [vmem:[%s9] sm:$0xff] %v843
    // Predicated region
    $region54: #{actor_forward.1} parent=1 // pred_check
      _
    $region55: #{actor_forward.1} parent=1 // pred_check_branch
      %850 = sbr.rel (0) target = $region57
    $region56: #{actor_forward.1} parent=1 // pred_region
      _
    $region57: #{actor_forward.1} parent=1 // pred_fallthru
      _
    // Predicated region
    $region58: #{actor_forward.1} parent=1 // pred_check
      _
    $region59: #{actor_forward.1} parent=1 // pred_check_branch
      %852 = sbr.rel (0) target = $region61
    $region60: #{actor_forward.1} parent=1 // pred_region
      _
    $region61: #{actor_forward.1} parent=1 // pred_fallthru
      _
    %853 = vsyncpa [#allocation3], 1
    %854 = vsyncpa [#allocation5], 1
    %855 = vsyncpa [#allocation8], 1

</llo_original>
